<compile_context>
chip_gen: v5e
topology: v5e:2x2
jax: 0.10.0
libtpu: 0.0.40
codegen_flags: <defaults>
</compile_context>

<pallas_src>
import functools

import jax
import jax.numpy as jnp
from jax.experimental import pallas as pl
from jax.experimental.pallas import tpu as pltpu


def net_kernel(x_ref, wih_ref, whh_ref, blstm_ref, w1_ref, b1_ref, w2_ref, b2_ref,
               out_ref, hs_ref, *, S, B, H):
    """Single-invocation fused LSTM + 2-layer MLP head.

    x_ref:    (S*B, In)  time-major flattened input (row t*B + b)
    wih_ref:  (In, 4H)   pre-transposed W_ih
    whh_ref:  (H, 4H)    pre-transposed W_hh
    blstm_ref:(1, 4H)    b_ih + b_hh
    w1_ref:   (H, 5H), b1_ref: (1, 5H)
    w2_ref:   (5H, Out), b2_ref: (1, Out)
    out_ref:  (S*B, Out)
    hs_ref:   (S*B, H)   VMEM scratch collecting hidden states
    """
    # ---- input projection for ALL timesteps at once (hoisted off the serial path) ----
    # (S*B, In) @ (In, 4H): 64 rows presented to the MXU instead of 8 per step.
    # Bias broadcast happens exactly once (not per timestep).
    xg = (jnp.dot(x_ref[...], wih_ref[...], preferred_element_type=jnp.float32)
          + blstm_ref[...])                                       # (S*B, 4H)

    whh = whh_ref[...]                                            # (H, 4H), loaded once

    h = jnp.zeros((B, H), jnp.float32)
    c = jnp.zeros((B, H), jnp.float32)

    # ---- serial recurrence: only h @ W_hh + gate elementwise work per step ----
    for t in range(S):                                            # fully unrolled (S small)
        gates = xg[t * B:(t + 1) * B, :] + jnp.dot(
            h, whh, preferred_element_type=jnp.float32)           # (B, 4H) == one f32 vreg row-group
        # Full-width nonlinearities (2 EUP ops per step instead of 4 quarter-width),
        # PyTorch gate order i, f, g, o along the 4H lane axis.
        sig = jax.nn.sigmoid(gates)
        tah = jnp.tanh(gates)
        i_g = sig[:, 0:H]
        f_g = sig[:, H:2 * H]
        g_g = tah[:, 2 * H:3 * H]
        o_g = sig[:, 3 * H:4 * H]
        c = f_g * c + i_g * g_g
        h = o_g * jnp.tanh(c)
        hs_ref[t * B:(t + 1) * B, :] = h                          # static, 8-sublane-aligned store

    # ---- feed-forward head, batched over all (t, b) rows (off the serial path) ----
    hs = hs_ref[...]                                              # (S*B, H)
    y1 = jnp.dot(hs, w1_ref[...], preferred_element_type=jnp.float32) + b1_ref[...]
    y2 = jnp.dot(y1, w2_ref[...], preferred_element_type=jnp.float32) + b2_ref[...]
    out_ref[...] = y2                                             # single slab write / one writeback DMA


def net_forward(x, params):
    """x: (B, S, In) float32.  Returns (B, S, Out)."""
    B, S, In = x.shape
    H = params["whh"].shape[0]
    Out = params["w2"].shape[1]

    # Time-major flatten: row (t*B + b) holds timestep t, batch element b.
    x_tm = jnp.transpose(x, (1, 0, 2)).reshape(S * B, In)

    wih, whh, blstm = params["wih"], params["whh"], params["blstm"]
    w1, b1, w2, b2 = params["w1"], params["b1"], params["w2"], params["b2"]

    full2d = lambda arr: pl.BlockSpec(arr.shape, lambda i: (0, 0))

    kernel = functools.partial(net_kernel, S=S, B=B, H=H)

    # Everything fits comfortably in VMEM at these sizes (few tens of KB), so the
    # whole forward runs as a single grid step with no per-timestep pipeline overhead.
    # TODO(synk): for large H on v7x (64 MiB VMEM) or large B, tile W_hh / add a
    # parallel batch grid axis; unnecessary at these toy sizes.
    out_flat = pl.pallas_call(
        kernel,
        out_shape=jax.ShapeDtypeStruct((S * B, Out), jnp.float32),
        grid_spec=pltpu.PrefetchScalarGridSpec(
            num_scalar_prefetch=0,
            grid=(1,),
            in_specs=[full2d(x_tm), full2d(wih), full2d(whh), full2d(blstm),
                      full2d(w1), full2d(b1), full2d(w2), full2d(b2)],
            out_specs=pl.BlockSpec((S * B, Out), lambda i: (0, 0)),
            scratch_shapes=[pltpu.VMEM((S * B, H), jnp.float32)],   # hidden-state collector
        ),
        compiler_params=pltpu.CompilerParams(
            dimension_semantics=("arbitrary",),
        ),
    )(x_tm, wih, whh, blstm, w1, b1, w2, b2)

    return jnp.transpose(out_flat.reshape(S, B, Out), (1, 0, 2))   # (B, S, Out)


def reference_forward(x, params):
    """Pure-JAX reference matching nn.LSTM(batch_first=True) + 2 Linears."""
    B, S, In = x.shape
    H = params["whh"].shape[0]
    h = jnp.zeros((B, H), jnp.float32)
    c = jnp.zeros((B, H), jnp.float32)

    def step(carry, x_t):
        h, c = carry
        gates = x_t @ params["wih"] + h @ params["whh"] + params["blstm"][0]
        i = jax.nn.sigmoid(gates[:, 0:H])
        f = jax.nn.sigmoid(gates[:, H:2 * H])
        g = jnp.tanh(gates[:, 2 * H:3 * H])
        o = jax.nn.sigmoid(gates[:, 3 * H:4 * H])
        c = f * c + i * g
        h = o * jnp.tanh(c)
        return (h, c), h

    (_, _), hs = jax.lax.scan(step, (h, c), jnp.transpose(x, (1, 0, 2)))
    hs = jnp.transpose(hs, (1, 0, 2))                       # (B, S, H)
    y1 = hs @ params["w1"] + params["b1"][0]
    y2 = y1 @ params["w2"] + params["b2"][0]
    return y2


def init_params(key, input_size, hidden_size, output_size):
    """Deterministic init mimicking PyTorch uniform(-1/sqrt(H), 1/sqrt(H))."""
    H = hidden_size
    ks = jax.random.split(key, 10)
    bound = 1.0 / jnp.sqrt(jnp.float32(H))
    u = lambda k, shape: jax.random.uniform(k, shape, jnp.float32, -bound, bound)
    w_ih = u(ks[0], (4 * H, input_size))
    w_hh = u(ks[1], (4 * H, H))
    b_ih = u(ks[2], (4 * H,))
    b_hh = u(ks[3], (4 * H,))
    w1 = u(ks[4], (5 * H, H))
    b1 = u(ks[5], (5 * H,))
    w2 = u(ks[6], (output_size, 5 * H))
    b2 = u(ks[7], (output_size,))
    return {
        "wih": w_ih.T,                       # (In, 4H)
        "whh": w_hh.T,                       # (H, 4H)
        "blstm": (b_ih + b_hh)[None, :],     # (1, 4H)
        "w1": w1.T,                          # (H, 5H)
        "b1": b1[None, :],                   # (1, 5H)
        "w2": w2.T,                          # (5H, Out)
        "b2": b2[None, :],                   # (1, Out)
    }


if __name__ == "__main__":
    key = jax.random.PRNGKey(0)
    B, S, In, H, Out = 8, 8, 16, 32, 4   # batch, seq, input_size, hidden_size, output_size

    k_x, k_p = jax.random.split(key)
    x = jax.random.normal(k_x, (B, S, In), jnp.float32)
    params = init_params(k_p, In, H, Out)

    out = net_forward(x, params)
    out = jax.block_until_ready(out)

    ref = reference_forward(x, params)
    assert out.shape == (B, S, Out)
    assert jnp.allclose(out, ref, atol=1e-4, rtol=1e-4), "mismatch vs JAX reference"

    print("KERNEL_OK")
</pallas_src>

<mosaic_0001>
module attributes {stable_mosaic.version = 11 : i64} {
  func.func @net_kernel(%arg0: i32, %arg1: memref<64x16xf32, #tpu.memory_space<vmem>>, %arg2: memref<16x128xf32, #tpu.memory_space<vmem>>, %arg3: memref<32x128xf32, #tpu.memory_space<vmem>>, %arg4: memref<1x128xf32, #tpu.memory_space<vmem>>, %arg5: memref<32x160xf32, #tpu.memory_space<vmem>>, %arg6: memref<1x160xf32, #tpu.memory_space<vmem>>, %arg7: memref<160x4xf32, #tpu.memory_space<vmem>>, %arg8: memref<1x4xf32, #tpu.memory_space<vmem>>, %arg9: memref<64x4xf32, #tpu.memory_space<vmem>>, %arg10: memref<64x32xf32, #tpu.memory_space<vmem>>) attributes {dimension_semantics = [#tpu.dimension_semantics<arbitrary>], iteration_bounds = array<i64: 1>, scalar_prefetch = 0 : i64, scratch_operands = 1 : i64, tpu.core_type = #tpu.core_type<tc>, window_params = [{pipeline_mode = #tpu.pipeline_mode<synchronous>, transform_indices = @transform_0, window_bounds = array<i64: 64, 16>}, {pipeline_mode = #tpu.pipeline_mode<synchronous>, transform_indices = @transform_1, window_bounds = array<i64: 16, 128>}, {pipeline_mode = #tpu.pipeline_mode<synchronous>, transform_indices = @transform_2, window_bounds = array<i64: 32, 128>}, {pipeline_mode = #tpu.pipeline_mode<synchronous>, transform_indices = @transform_3, window_bounds = array<i64: 1, 128>}, {pipeline_mode = #tpu.pipeline_mode<synchronous>, transform_indices = @transform_4, window_bounds = array<i64: 32, 160>}, {pipeline_mode = #tpu.pipeline_mode<synchronous>, transform_indices = @transform_5, window_bounds = array<i64: 1, 160>}, {pipeline_mode = #tpu.pipeline_mode<synchronous>, transform_indices = @transform_6, window_bounds = array<i64: 160, 4>}, {pipeline_mode = #tpu.pipeline_mode<synchronous>, transform_indices = @transform_7, window_bounds = array<i64: 1, 4>}, {pipeline_mode = #tpu.pipeline_mode<synchronous>, transform_indices = @transform_8, window_bounds = array<i64: 64, 4>}]} {
    %c0 = arith.constant 0 : index
    %c0_0 = arith.constant 0 : index
    %0 = vector.load %arg1[%c0, %c0_0] : memref<64x16xf32, #tpu.memory_space<vmem>>, vector<64x16xf32>
    %c0_1 = arith.constant 0 : index
    %c0_2 = arith.constant 0 : index
    %1 = vector.load %arg2[%c0_1, %c0_2] : memref<16x128xf32, #tpu.memory_space<vmem>>, vector<16x128xf32>
    %cst = arith.constant dense<0.000000e+00> : vector<64x128xf32>
    %2 = tpu.matmul %0, %1, %cst {dimension_numbers = #tpu.dot_dimension_numbers<[1], [0], [0], [1], [0, 0, 1, 1], [], []>} : vector<64x16xf32>, vector<16x128xf32>, vector<64x128xf32> -> vector<64x128xf32>
    %c0_3 = arith.constant 0 : index
    %c0_4 = arith.constant 0 : index
    %3 = vector.load %arg4[%c0_3, %c0_4] : memref<1x128xf32, #tpu.memory_space<vmem>>, vector<1x128xf32>
    %4 = vector.broadcast %3 : vector<1x128xf32> to vector<64x128xf32>
    %5 = arith.addf %2, %4 : vector<64x128xf32>
    %c0_5 = arith.constant 0 : index
    %c0_6 = arith.constant 0 : index
    %6 = vector.load %arg3[%c0_5, %c0_6] : memref<32x128xf32, #tpu.memory_space<vmem>>, vector<32x128xf32>
    %cst_7 = arith.constant 0.000000e+00 : f32
    %7 = vector.broadcast %cst_7 : f32 to vector<8x32xf32>
    %cst_8 = arith.constant 0.000000e+00 : f32
    %8 = vector.broadcast %cst_8 : f32 to vector<8x32xf32>
    %9 = vector.extract_strided_slice %5 {offsets = [0, 0], sizes = [8, 128], strides = [1, 1]} : vector<64x128xf32> to vector<8x128xf32>
    %cst_9 = arith.constant dense<0.000000e+00> : vector<8x128xf32>
    %10 = tpu.matmul %7, %6, %cst_9 {dimension_numbers = #tpu.dot_dimension_numbers<[1], [0], [0], [1], [0, 0, 1, 1], [], []>} : vector<8x32xf32>, vector<32x128xf32>, vector<8x128xf32> -> vector<8x128xf32>
    %11 = arith.addf %9, %10 : vector<8x128xf32>
    %12 = arith.negf %11 : vector<8x128xf32>
    %13 = math.exp %12 : vector<8x128xf32>
    %cst_10 = arith.constant 1.000000e+00 : f32
    %14 = vector.broadcast %cst_10 : f32 to vector<8x128xf32>
    %15 = arith.addf %14, %13 : vector<8x128xf32>
    %16 = arith.divf %14, %15 : vector<8x128xf32>
    %17 = math.tanh %11 : vector<8x128xf32>
    %18 = vector.extract_strided_slice %16 {offsets = [0, 0], sizes = [8, 32], strides = [1, 1]} : vector<8x128xf32> to vector<8x32xf32>
    %19 = vector.extract_strided_slice %16 {offsets = [0, 32], sizes = [8, 32], strides = [1, 1]} : vector<8x128xf32> to vector<8x32xf32>
    %20 = vector.extract_strided_slice %17 {offsets = [0, 64], sizes = [8, 32], strides = [1, 1]} : vector<8x128xf32> to vector<8x32xf32>
    %21 = vector.extract_strided_slice %16 {offsets = [0, 96], sizes = [8, 32], strides = [1, 1]} : vector<8x128xf32> to vector<8x32xf32>
    %22 = arith.mulf %19, %8 : vector<8x32xf32>
    %23 = arith.mulf %18, %20 : vector<8x32xf32>
    %24 = arith.addf %22, %23 : vector<8x32xf32>
    %25 = math.tanh %24 : vector<8x32xf32>
    %26 = arith.mulf %21, %25 : vector<8x32xf32>
    %c0_11 = arith.constant 0 : index
    %c0_12 = arith.constant 0 : index
    %27 = vector.load %arg10[%c0_11, %c0_12] : memref<64x32xf32, #tpu.memory_space<vmem>>, vector<8x32xf32>
    tpu.vector_store %arg10[%c0_11, %c0_12], %26 {strides = array<i32>} : memref<64x32xf32, #tpu.memory_space<vmem>>, vector<8x32xf32>,
    %28 = vector.extract_strided_slice %5 {offsets = [8, 0], sizes = [8, 128], strides = [1, 1]} : vector<64x128xf32> to vector<8x128xf32>
    %cst_13 = arith.constant dense<0.000000e+00> : vector<8x128xf32>
    %29 = tpu.matmul %26, %6, %cst_13 {dimension_numbers = #tpu.dot_dimension_numbers<[1], [0], [0], [1], [0, 0, 1, 1], [], []>} : vector<8x32xf32>, vector<32x128xf32>, vector<8x128xf32> -> vector<8x128xf32>
    %30 = arith.addf %28, %29 : vector<8x128xf32>
    %31 = arith.negf %30 : vector<8x128xf32>
    %32 = math.exp %31 : vector<8x128xf32>
    %cst_14 = arith.constant 1.000000e+00 : f32
    %33 = vector.broadcast %cst_14 : f32 to vector<8x128xf32>
    %34 = arith.addf %33, %32 : vector<8x128xf32>
    %35 = arith.divf %33, %34 : vector<8x128xf32>
    %36 = math.tanh %30 : vector<8x128xf32>
    %37 = vector.extract_strided_slice %35 {offsets = [0, 0], sizes = [8, 32], strides = [1, 1]} : vector<8x128xf32> to vector<8x32xf32>
    %38 = vector.extract_strided_slice %35 {offsets = [0, 32], sizes = [8, 32], strides = [1, 1]} : vector<8x128xf32> to vector<8x32xf32>
    %39 = vector.extract_strided_slice %36 {offsets = [0, 64], sizes = [8, 32], strides = [1, 1]} : vector<8x128xf32> to vector<8x32xf32>
    %40 = vector.extract_strided_slice %35 {offsets = [0, 96], sizes = [8, 32], strides = [1, 1]} : vector<8x128xf32> to vector<8x32xf32>
    %41 = arith.mulf %38, %24 : vector<8x32xf32>
    %42 = arith.mulf %37, %39 : vector<8x32xf32>
    %43 = arith.addf %41, %42 : vector<8x32xf32>
    %44 = math.tanh %43 : vector<8x32xf32>
    %45 = arith.mulf %40, %44 : vector<8x32xf32>
    %c8 = arith.constant 8 : index
    %c0_15 = arith.constant 0 : index
    %46 = vector.load %arg10[%c8, %c0_15] : memref<64x32xf32, #tpu.memory_space<vmem>>, vector<8x32xf32>
    tpu.vector_store %arg10[%c8, %c0_15], %45 {strides = array<i32>} : memref<64x32xf32, #tpu.memory_space<vmem>>, vector<8x32xf32>,
    %47 = vector.extract_strided_slice %5 {offsets = [16, 0], sizes = [8, 128], strides = [1, 1]} : vector<64x128xf32> to vector<8x128xf32>
    %cst_16 = arith.constant dense<0.000000e+00> : vector<8x128xf32>
    %48 = tpu.matmul %45, %6, %cst_16 {dimension_numbers = #tpu.dot_dimension_numbers<[1], [0], [0], [1], [0, 0, 1, 1], [], []>} : vector<8x32xf32>, vector<32x128xf32>, vector<8x128xf32> -> vector<8x128xf32>
    %49 = arith.addf %47, %48 : vector<8x128xf32>
    %50 = arith.negf %49 : vector<8x128xf32>
    %51 = math.exp %50 : vector<8x128xf32>
    %cst_17 = arith.constant 1.000000e+00 : f32
    %52 = vector.broadcast %cst_17 : f32 to vector<8x128xf32>
    %53 = arith.addf %52, %51 : vector<8x128xf32>
    %54 = arith.divf %52, %53 : vector<8x128xf32>
    %55 = math.tanh %49 : vector<8x128xf32>
    %56 = vector.extract_strided_slice %54 {offsets = [0, 0], sizes = [8, 32], strides = [1, 1]} : vector<8x128xf32> to vector<8x32xf32>
    %57 = vector.extract_strided_slice %54 {offsets = [0, 32], sizes = [8, 32], strides = [1, 1]} : vector<8x128xf32> to vector<8x32xf32>
    %58 = vector.extract_strided_slice %55 {offsets = [0, 64], sizes = [8, 32], strides = [1, 1]} : vector<8x128xf32> to vector<8x32xf32>
    %59 = vector.extract_strided_slice %54 {offsets = [0, 96], sizes = [8, 32], strides = [1, 1]} : vector<8x128xf32> to vector<8x32xf32>
    %60 = arith.mulf %57, %43 : vector<8x32xf32>
    %61 = arith.mulf %56, %58 : vector<8x32xf32>
    %62 = arith.addf %60, %61 : vector<8x32xf32>
    %63 = math.tanh %62 : vector<8x32xf32>
    %64 = arith.mulf %59, %63 : vector<8x32xf32>
    %c16 = arith.constant 16 : index
    %c0_18 = arith.constant 0 : index
    %65 = vector.load %arg10[%c16, %c0_18] : memref<64x32xf32, #tpu.memory_space<vmem>>, vector<8x32xf32>
    tpu.vector_store %arg10[%c16, %c0_18], %64 {strides = array<i32>} : memref<64x32xf32, #tpu.memory_space<vmem>>, vector<8x32xf32>,
    %66 = vector.extract_strided_slice %5 {offsets = [24, 0], sizes = [8, 128], strides = [1, 1]} : vector<64x128xf32> to vector<8x128xf32>
    %cst_19 = arith.constant dense<0.000000e+00> : vector<8x128xf32>
    %67 = tpu.matmul %64, %6, %cst_19 {dimension_numbers = #tpu.dot_dimension_numbers<[1], [0], [0], [1], [0, 0, 1, 1], [], []>} : vector<8x32xf32>, vector<32x128xf32>, vector<8x128xf32> -> vector<8x128xf32>
    %68 = arith.addf %66, %67 : vector<8x128xf32>
    %69 = arith.negf %68 : vector<8x128xf32>
    %70 = math.exp %69 : vector<8x128xf32>
    %cst_20 = arith.constant 1.000000e+00 : f32
    %71 = vector.broadcast %cst_20 : f32 to vector<8x128xf32>
    %72 = arith.addf %71, %70 : vector<8x128xf32>
    %73 = arith.divf %71, %72 : vector<8x128xf32>
    %74 = math.tanh %68 : vector<8x128xf32>
    %75 = vector.extract_strided_slice %73 {offsets = [0, 0], sizes = [8, 32], strides = [1, 1]} : vector<8x128xf32> to vector<8x32xf32>
    %76 = vector.extract_strided_slice %73 {offsets = [0, 32], sizes = [8, 32], strides = [1, 1]} : vector<8x128xf32> to vector<8x32xf32>
    %77 = vector.extract_strided_slice %74 {offsets = [0, 64], sizes = [8, 32], strides = [1, 1]} : vector<8x128xf32> to vector<8x32xf32>
    %78 = vector.extract_strided_slice %73 {offsets = [0, 96], sizes = [8, 32], strides = [1, 1]} : vector<8x128xf32> to vector<8x32xf32>
    %79 = arith.mulf %76, %62 : vector<8x32xf32>
    %80 = arith.mulf %75, %77 : vector<8x32xf32>
    %81 = arith.addf %79, %80 : vector<8x32xf32>
    %82 = math.tanh %81 : vector<8x32xf32>
    %83 = arith.mulf %78, %82 : vector<8x32xf32>
    %c24 = arith.constant 24 : index
    %c0_21 = arith.constant 0 : index
    %84 = vector.load %arg10[%c24, %c0_21] : memref<64x32xf32, #tpu.memory_space<vmem>>, vector<8x32xf32>
    tpu.vector_store %arg10[%c24, %c0_21], %83 {strides = array<i32>} : memref<64x32xf32, #tpu.memory_space<vmem>>, vector<8x32xf32>,
    %85 = vector.extract_strided_slice %5 {offsets = [32, 0], sizes = [8, 128], strides = [1, 1]} : vector<64x128xf32> to vector<8x128xf32>
    %cst_22 = arith.constant dense<0.000000e+00> : vector<8x128xf32>
    %86 = tpu.matmul %83, %6, %cst_22 {dimension_numbers = #tpu.dot_dimension_numbers<[1], [0], [0], [1], [0, 0, 1, 1], [], []>} : vector<8x32xf32>, vector<32x128xf32>, vector<8x128xf32> -> vector<8x128xf32>
    %87 = arith.addf %85, %86 : vector<8x128xf32>
    %88 = arith.negf %87 : vector<8x128xf32>
    %89 = math.exp %88 : vector<8x128xf32>
    %cst_23 = arith.constant 1.000000e+00 : f32
    %90 = vector.broadcast %cst_23 : f32 to vector<8x128xf32>
    %91 = arith.addf %90, %89 : vector<8x128xf32>
    %92 = arith.divf %90, %91 : vector<8x128xf32>
    %93 = math.tanh %87 : vector<8x128xf32>
    %94 = vector.extract_strided_slice %92 {offsets = [0, 0], sizes = [8, 32], strides = [1, 1]} : vector<8x128xf32> to vector<8x32xf32>
    %95 = vector.extract_strided_slice %92 {offsets = [0, 32], sizes = [8, 32], strides = [1, 1]} : vector<8x128xf32> to vector<8x32xf32>
    %96 = vector.extract_strided_slice %93 {offsets = [0, 64], sizes = [8, 32], strides = [1, 1]} : vector<8x128xf32> to vector<8x32xf32>
    %97 = vector.extract_strided_slice %92 {offsets = [0, 96], sizes = [8, 32], strides = [1, 1]} : vector<8x128xf32> to vector<8x32xf32>
    %98 = arith.mulf %95, %81 : vector<8x32xf32>
    %99 = arith.mulf %94, %96 : vector<8x32xf32>
    %100 = arith.addf %98, %99 : vector<8x32xf32>
    %101 = math.tanh %100 : vector<8x32xf32>
    %102 = arith.mulf %97, %101 : vector<8x32xf32>
    %c32 = arith.constant 32 : index
    %c0_24 = arith.constant 0 : index
    %103 = vector.load %arg10[%c32, %c0_24] : memref<64x32xf32, #tpu.memory_space<vmem>>, vector<8x32xf32>
    tpu.vector_store %arg10[%c32, %c0_24], %102 {strides = array<i32>} : memref<64x32xf32, #tpu.memory_space<vmem>>, vector<8x32xf32>,
    %104 = vector.extract_strided_slice %5 {offsets = [40, 0], sizes = [8, 128], strides = [1, 1]} : vector<64x128xf32> to vector<8x128xf32>
    %cst_25 = arith.constant dense<0.000000e+00> : vector<8x128xf32>
    %105 = tpu.matmul %102, %6, %cst_25 {dimension_numbers = #tpu.dot_dimension_numbers<[1], [0], [0], [1], [0, 0, 1, 1], [], []>} : vector<8x32xf32>, vector<32x128xf32>, vector<8x128xf32> -> vector<8x128xf32>
    %106 = arith.addf %104, %105 : vector<8x128xf32>
    %107 = arith.negf %106 : vector<8x128xf32>
    %108 = math.exp %107 : vector<8x128xf32>
    %cst_26 = arith.constant 1.000000e+00 : f32
    %109 = vector.broadcast %cst_26 : f32 to vector<8x128xf32>
    %110 = arith.addf %109, %108 : vector<8x128xf32>
    %111 = arith.divf %109, %110 : vector<8x128xf32>
    %112 = math.tanh %106 : vector<8x128xf32>
    %113 = vector.extract_strided_slice %111 {offsets = [0, 0], sizes = [8, 32], strides = [1, 1]} : vector<8x128xf32> to vector<8x32xf32>
    %114 = vector.extract_strided_slice %111 {offsets = [0, 32], sizes = [8, 32], strides = [1, 1]} : vector<8x128xf32> to vector<8x32xf32>
    %115 = vector.extract_strided_slice %112 {offsets = [0, 64], sizes = [8, 32], strides = [1, 1]} : vector<8x128xf32> to vector<8x32xf32>
    %116 = vector.extract_strided_slice %111 {offsets = [0, 96], sizes = [8, 32], strides = [1, 1]} : vector<8x128xf32> to vector<8x32xf32>
    %117 = arith.mulf %114, %100 : vector<8x32xf32>
    %118 = arith.mulf %113, %115 : vector<8x32xf32>
    %119 = arith.addf %117, %118 : vector<8x32xf32>
    %120 = math.tanh %119 : vector<8x32xf32>
    %121 = arith.mulf %116, %120 : vector<8x32xf32>
    %c40 = arith.constant 40 : index
    %c0_27 = arith.constant 0 : index
    %122 = vector.load %arg10[%c40, %c0_27] : memref<64x32xf32, #tpu.memory_space<vmem>>, vector<8x32xf32>
    tpu.vector_store %arg10[%c40, %c0_27], %121 {strides = array<i32>} : memref<64x32xf32, #tpu.memory_space<vmem>>, vector<8x32xf32>,
    %123 = vector.extract_strided_slice %5 {offsets = [48, 0], sizes = [8, 128], strides = [1, 1]} : vector<64x128xf32> to vector<8x128xf32>
    %cst_28 = arith.constant dense<0.000000e+00> : vector<8x128xf32>
    %124 = tpu.matmul %121, %6, %cst_28 {dimension_numbers = #tpu.dot_dimension_numbers<[1], [0], [0], [1], [0, 0, 1, 1], [], []>} : vector<8x32xf32>, vector<32x128xf32>, vector<8x128xf32> -> vector<8x128xf32>
    %125 = arith.addf %123, %124 : vector<8x128xf32>
    %126 = arith.negf %125 : vector<8x128xf32>
    %127 = math.exp %126 : vector<8x128xf32>
    %cst_29 = arith.constant 1.000000e+00 : f32
    %128 = vector.broadcast %cst_29 : f32 to vector<8x128xf32>
    %129 = arith.addf %128, %127 : vector<8x128xf32>
    %130 = arith.divf %128, %129 : vector<8x128xf32>
    %131 = math.tanh %125 : vector<8x128xf32>
    %132 = vector.extract_strided_slice %130 {offsets = [0, 0], sizes = [8, 32], strides = [1, 1]} : vector<8x128xf32> to vector<8x32xf32>
    %133 = vector.extract_strided_slice %130 {offsets = [0, 32], sizes = [8, 32], strides = [1, 1]} : vector<8x128xf32> to vector<8x32xf32>
    %134 = vector.extract_strided_slice %131 {offsets = [0, 64], sizes = [8, 32], strides = [1, 1]} : vector<8x128xf32> to vector<8x32xf32>
    %135 = vector.extract_strided_slice %130 {offsets = [0, 96], sizes = [8, 32], strides = [1, 1]} : vector<8x128xf32> to vector<8x32xf32>
    %136 = arith.mulf %133, %119 : vector<8x32xf32>
    %137 = arith.mulf %132, %134 : vector<8x32xf32>
    %138 = arith.addf %136, %137 : vector<8x32xf32>
    %139 = math.tanh %138 : vector<8x32xf32>
    %140 = arith.mulf %135, %139 : vector<8x32xf32>
    %c48 = arith.constant 48 : index
    %c0_30 = arith.constant 0 : index
    %141 = vector.load %arg10[%c48, %c0_30] : memref<64x32xf32, #tpu.memory_space<vmem>>, vector<8x32xf32>
    tpu.vector_store %arg10[%c48, %c0_30], %140 {strides = array<i32>} : memref<64x32xf32, #tpu.memory_space<vmem>>, vector<8x32xf32>,
    %142 = vector.extract_strided_slice %5 {offsets = [56, 0], sizes = [8, 128], strides = [1, 1]} : vector<64x128xf32> to vector<8x128xf32>
    %cst_31 = arith.constant dense<0.000000e+00> : vector<8x128xf32>
    %143 = tpu.matmul %140, %6, %cst_31 {dimension_numbers = #tpu.dot_dimension_numbers<[1], [0], [0], [1], [0, 0, 1, 1], [], []>} : vector<8x32xf32>, vector<32x128xf32>, vector<8x128xf32> -> vector<8x128xf32>
    %144 = arith.addf %142, %143 : vector<8x128xf32>
    %145 = arith.negf %144 : vector<8x128xf32>
    %146 = math.exp %145 : vector<8x128xf32>
    %cst_32 = arith.constant 1.000000e+00 : f32
    %147 = vector.broadcast %cst_32 : f32 to vector<8x128xf32>
    %148 = arith.addf %147, %146 : vector<8x128xf32>
    %149 = arith.divf %147, %148 : vector<8x128xf32>
    %150 = math.tanh %144 : vector<8x128xf32>
    %151 = vector.extract_strided_slice %149 {offsets = [0, 0], sizes = [8, 32], strides = [1, 1]} : vector<8x128xf32> to vector<8x32xf32>
    %152 = vector.extract_strided_slice %149 {offsets = [0, 32], sizes = [8, 32], strides = [1, 1]} : vector<8x128xf32> to vector<8x32xf32>
    %153 = vector.extract_strided_slice %150 {offsets = [0, 64], sizes = [8, 32], strides = [1, 1]} : vector<8x128xf32> to vector<8x32xf32>
    %154 = vector.extract_strided_slice %149 {offsets = [0, 96], sizes = [8, 32], strides = [1, 1]} : vector<8x128xf32> to vector<8x32xf32>
    %155 = arith.mulf %152, %138 : vector<8x32xf32>
    %156 = arith.mulf %151, %153 : vector<8x32xf32>
    %157 = arith.addf %155, %156 : vector<8x32xf32>
    %158 = math.tanh %157 : vector<8x32xf32>
    %159 = arith.mulf %154, %158 : vector<8x32xf32>
    %c56 = arith.constant 56 : index
    %c0_33 = arith.constant 0 : index
    %160 = vector.load %arg10[%c56, %c0_33] : memref<64x32xf32, #tpu.memory_space<vmem>>, vector<8x32xf32>
    tpu.vector_store %arg10[%c56, %c0_33], %159 {strides = array<i32>} : memref<64x32xf32, #tpu.memory_space<vmem>>, vector<8x32xf32>,
    %c0_34 = arith.constant 0 : index
    %c0_35 = arith.constant 0 : index
    %161 = vector.load %arg10[%c0_34, %c0_35] : memref<64x32xf32, #tpu.memory_space<vmem>>, vector<64x32xf32>
    %c0_36 = arith.constant 0 : index
    %c0_37 = arith.constant 0 : index
    %162 = vector.load %arg5[%c0_36, %c0_37] : memref<32x160xf32, #tpu.memory_space<vmem>>, vector<32x160xf32>
    %cst_38 = arith.constant dense<0.000000e+00> : vector<64x160xf32>
    %163 = tpu.matmul %161, %162, %cst_38 {dimension_numbers = #tpu.dot_dimension_numbers<[1], [0], [0], [1], [0, 0, 1, 1], [], []>} : vector<64x32xf32>, vector<32x160xf32>, vector<64x160xf32> -> vector<64x160xf32>
    %c0_39 = arith.constant 0 : index
    %c0_40 = arith.constant 0 : index
    %164 = vector.load %arg6[%c0_39, %c0_40] : memref<1x160xf32, #tpu.memory_space<vmem>>, vector<1x160xf32>
    %165 = vector.broadcast %164 : vector<1x160xf32> to vector<64x160xf32>
    %166 = arith.addf %163, %165 : vector<64x160xf32>
    %c0_41 = arith.constant 0 : index
    %c0_42 = arith.constant 0 : index
    %167 = vector.load %arg7[%c0_41, %c0_42] : memref<160x4xf32, #tpu.memory_space<vmem>>, vector<160x4xf32>
    %cst_43 = arith.constant dense<0.000000e+00> : vector<64x4xf32>
    %168 = tpu.matmul %166, %167, %cst_43 {dimension_numbers = #tpu.dot_dimension_numbers<[1], [0], [0], [1], [0, 0, 1, 1], [], []>} : vector<64x160xf32>, vector<160x4xf32>, vector<64x4xf32> -> vector<64x4xf32>
    %c0_44 = arith.constant 0 : index
    %c0_45 = arith.constant 0 : index
    %169 = vector.load %arg8[%c0_44, %c0_45] : memref<1x4xf32, #tpu.memory_space<vmem>>, vector<1x4xf32>
    %170 = vector.broadcast %169 : vector<1x4xf32> to vector<64x4xf32>
    %171 = arith.addf %168, %170 : vector<64x4xf32>
    %c0_46 = arith.constant 0 : index
    %c0_47 = arith.constant 0 : index
    %172 = vector.load %arg9[%c0_46, %c0_47] : memref<64x4xf32, #tpu.memory_space<vmem>>, vector<64x4xf32>
    tpu.vector_store %arg9[%c0_46, %c0_47], %171 {strides = array<i32>} : memref<64x4xf32, #tpu.memory_space<vmem>>, vector<64x4xf32>,
    return
  }
  func.func @transform_0(%arg0: i32) -> (i32, i32) {
    %c0_i32 = arith.constant 0 : i32
    %c0_i32_0 = arith.constant 0 : i32
    %c0_i32_1 = arith.constant 0 : i32
    return %c0_i32, %c0_i32_0 : i32, i32
  }
  func.func @transform_1(%arg0: i32) -> (i32, i32) {
    %c0_i32 = arith.constant 0 : i32
    %c0_i32_0 = arith.constant 0 : i32
    %c0_i32_1 = arith.constant 0 : i32
    return %c0_i32, %c0_i32_0 : i32, i32
  }
  func.func @transform_2(%arg0: i32) -> (i32, i32) {
    %c0_i32 = arith.constant 0 : i32
    %c0_i32_0 = arith.constant 0 : i32
    %c0_i32_1 = arith.constant 0 : i32
    return %c0_i32, %c0_i32_0 : i32, i32
  }
  func.func @transform_3(%arg0: i32) -> (i32, i32) {
    %c0_i32 = arith.constant 0 : i32
    %c0_i32_0 = arith.constant 0 : i32
    %c0_i32_1 = arith.constant 0 : i32
    return %c0_i32, %c0_i32_0 : i32, i32
  }
  func.func @transform_4(%arg0: i32) -> (i32, i32) {
    %c0_i32 = arith.constant 0 : i32
    %c0_i32_0 = arith.constant 0 : i32
    %c0_i32_1 = arith.constant 0 : i32
    return %c0_i32, %c0_i32_0 : i32, i32
  }
  func.func @transform_5(%arg0: i32) -> (i32, i32) {
    %c0_i32 = arith.constant 0 : i32
    %c0_i32_0 = arith.constant 0 : i32
    %c0_i32_1 = arith.constant 0 : i32
    return %c0_i32, %c0_i32_0 : i32, i32
  }
  func.func @transform_6(%arg0: i32) -> (i32, i32) {
    %c0_i32 = arith.constant 0 : i32
    %c0_i32_0 = arith.constant 0 : i32
    %c0_i32_1 = arith.constant 0 : i32
    return %c0_i32, %c0_i32_0 : i32, i32
  }
  func.func @transform_7(%arg0: i32) -> (i32, i32) {
    %c0_i32 = arith.constant 0 : i32
    %c0_i32_0 = arith.constant 0 : i32
    %c0_i32_1 = arith.constant 0 : i32
    return %c0_i32, %c0_i32_0 : i32, i32
  }
  func.func @transform_8(%arg0: i32) -> (i32, i32) {
    %c0_i32 = arith.constant 0 : i32
    %c0_i32_0 = arith.constant 0 : i32
    %c0_i32_1 = arith.constant 0 : i32
    return %c0_i32, %c0_i32_0 : i32, i32
  }
}

</mosaic_0001>

<llo_original>
// kernel: tpu_custom_call.1
$region0: #{tpu_custom_call.1}
  #allocation0 [shape = 'u32[]', space=smem, size = 0x4, offset = 0x4, fixed_abs, tag = 'smem constant byte address 0x4 - core index']
  #allocation1 [shape = 'u32[72,128]{1,0:T(1,128)}', space=vmem, size = 0x9000, scoped, tag = 'internal scratch']
  #allocation2 [shape = 'f32[64,32]{1,0:T(8,128)}', space=vmem, size = 0x8000, scoped, tag = 'scratch operand']
  %s0 = inlined_call_operand.vmem [shape: f32[64,16], index: 0, kind: input, shape index: {}]
  %s1 = inlined_call_operand.vmem [shape: f32[16,128], index: 1, kind: input, shape index: {}]
  %s2 = inlined_call_operand.vmem [shape: f32[32,128], index: 2, kind: input, shape index: {}]
  %s3 = inlined_call_operand.vmem [shape: f32[1,128], index: 3, kind: input, shape index: {}]
  %s4 = inlined_call_operand.vmem [shape: f32[32,160], index: 4, kind: input, shape index: {}]
  %s5 = inlined_call_operand.vmem [shape: f32[1,160], index: 5, kind: input, shape index: {}]
  %s6 = inlined_call_operand.vmem [shape: f32[160,4], index: 6, kind: input, shape index: {}]
  %s7 = inlined_call_operand.vmem [shape: f32[1,4], index: 7, kind: input, shape index: {}]
  %s8 = inlined_call_operand.vmem [shape: f32[64,4], index: 8, kind: output, shape index: {}]
  %s9 = sld [smem:[#allocation0]]
  $region42: #{tpu_custom_call.1} parent=0
    _
  %s11 = ssub.s32 1, %s9
  %s12 = scalar_select 0, %s11, %s9
  // Predicated region
  $region2: #{tpu_custom_call.1} parent=0 // pred_check
    _
  $region3: #{tpu_custom_call.1} parent=0 // pred_check_branch
    %14 = sbr.rel (0) target = $region5
  $region4: #{tpu_custom_call.1} parent=0 // pred_region
    _
  $region5: #{tpu_custom_call.1} parent=0 // pred_fallthru
    _
  // Predicated region
  $region6: #{tpu_custom_call.1} parent=0 // pred_check
    _
  $region7: #{tpu_custom_call.1} parent=0 // pred_check_branch
    %16 = sbr.rel (0) target = $region9
  $region8: #{tpu_custom_call.1} parent=0 // pred_region
    _
  $region9: #{tpu_custom_call.1} parent=0 // pred_fallthru
    _
  // Predicated region
  $region10: #{tpu_custom_call.1} parent=0 // pred_check
    _
  $region11: #{tpu_custom_call.1} parent=0 // pred_check_branch
    %18 = sbr.rel (0) target = $region13
  $region12: #{tpu_custom_call.1} parent=0 // pred_region
    _
  $region13: #{tpu_custom_call.1} parent=0 // pred_fallthru
    _
  // Predicated region
  $region14: #{tpu_custom_call.1} parent=0 // pred_check
    _
  $region15: #{tpu_custom_call.1} parent=0 // pred_check_branch
    %20 = sbr.rel (0) target = $region17
  $region16: #{tpu_custom_call.1} parent=0 // pred_region
    _
  $region17: #{tpu_custom_call.1} parent=0 // pred_fallthru
    _
  // Predicated region
  $region18: #{tpu_custom_call.1} parent=0 // pred_check
    _
  $region19: #{tpu_custom_call.1} parent=0 // pred_check_branch
    %22 = sbr.rel (0) target = $region21
  $region20: #{tpu_custom_call.1} parent=0 // pred_region
    _
  $region21: #{tpu_custom_call.1} parent=0 // pred_fallthru
    _
  // Predicated region
  $region22: #{tpu_custom_call.1} parent=0 // pred_check
    _
  $region23: #{tpu_custom_call.1} parent=0 // pred_check_branch
    %24 = sbr.rel (0) target = $region25
  $region24: #{tpu_custom_call.1} parent=0 // pred_region
    _
  $region25: #{tpu_custom_call.1} parent=0 // pred_fallthru
    _
  // Predicated region
  $region26: #{tpu_custom_call.1} parent=0 // pred_check
    _
  $region27: #{tpu_custom_call.1} parent=0 // pred_check_branch
    %26 = sbr.rel (0) target = $region29
  $region28: #{tpu_custom_call.1} parent=0 // pred_region
    _
  $region29: #{tpu_custom_call.1} parent=0 // pred_fallthru
    _
  // Predicated region
  $region30: #{tpu_custom_call.1} parent=0 // pred_check
    _
  $region31: #{tpu_custom_call.1} parent=0 // pred_check_branch
    %28 = sbr.rel (0) target = $region33
  $region32: #{tpu_custom_call.1} parent=0 // pred_region
    _
  $region33: #{tpu_custom_call.1} parent=0 // pred_fallthru
    _
  %v29 = vld [vmem:[%s0] sm:$0xff]
  %v30 = vld [vmem:[%s0 + $0x8] sm:$0xff]
  %v31 = vld [vmem:[%s0 + $0x10] sm:$0xff]
  %v32 = vld [vmem:[%s0 + $0x18] sm:$0xff]
  %v33 = vld [vmem:[%s0 + $0x20] sm:$0xff]
  %v34 = vld [vmem:[%s0 + $0x28] sm:$0xff]
  %v35 = vld [vmem:[%s0 + $0x30] sm:$0xff]
  %v36 = vld [vmem:[%s0 + $0x38] sm:$0xff]
  %v37 = vld [vmem:[%s1] sm:$0xff]
  %v38 = vld [vmem:[%s1 + $0x8] sm:$0xff]
  %v39 = vld [vmem:[%s3] sm:$0x1]
  %v41 = vperm.slane %v39, 0
  %vm43 = vcmask 130048
  %v45 = vsel %vm43, %v29, 0
  %v48 = vsel %vm43, %v30, 0
  %v51 = vsel %vm43, %v31, 0
  %v54 = vsel %vm43, %v32, 0
  %v57 = vsel %vm43, %v33, 0
  %v60 = vsel %vm43, %v34, 0
  %v63 = vsel %vm43, %v35, 0
  %v66 = vsel %vm43, %v36, 0
  %68 = vmatpush.msra.mxu0 0.0
  %69 = vmatpush.msra.mxu0 0.0
  %70 = vmatpush.msra.mxu0 0.0
  %71 = vmatpush.msra.mxu0 0.0
  %72 = vmatpush.msra.mxu0 0.0
  %73 = vmatpush.msra.mxu0 0.0
  %74 = vmatpush.msra.mxu0 0.0
  %75 = vmatpush.msra.mxu0 0.0
  %76 = vmatpush.msra.mxu0 0.0
  %77 = vmatpush.msra.mxu0 0.0
  %78 = vmatpush.msra.mxu0 0.0
  %79 = vmatpush.msra.mxu0 0.0
  %80 = vmatpush.msra.mxu0 0.0
  %81 = vmatpush.msra.mxu0 0.0
  %82 = vmatpush.msra.mxu0 %v38
  %83 = vmatpush.msra.mxu0 %v37
  %84 = vmatmul.f32.gmra.mxu0 %v45
  %v85 = vpop.f32.mrf.mxu0
  %v86 = vadd.f32 %v41, %v85
  %87 = vmatmul.f32.gmra.mxu0 %v48
  %v88 = vpop.f32.mrf.mxu0
  %v89 = vadd.f32 %v41, %v88
  %90 = vmatmul.f32.gmra.mxu0 %v51
  %v91 = vpop.f32.mrf.mxu0
  %v92 = vadd.f32 %v41, %v91
  %93 = vmatmul.f32.gmra.mxu0 %v54
  %v94 = vpop.f32.mrf.mxu0
  %v95 = vadd.f32 %v41, %v94
  %96 = vmatmul.f32.gmra.mxu0 %v57
  %v97 = vpop.f32.mrf.mxu0
  %v98 = vadd.f32 %v41, %v97
  %99 = vmatmul.f32.gmra.mxu0 %v60
  %v100 = vpop.f32.mrf.mxu0
  %v101 = vadd.f32 %v41, %v100
  %102 = vmatmul.f32.gmra.mxu0 %v63
  %v103 = vpop.f32.mrf.mxu0
  %v104 = vadd.f32 %v41, %v103
  %105 = vmatmul.f32.gmra.mxu0 %v66
  %v106 = vpop.f32.mrf.mxu0
  %v107 = vadd.f32 %v41, %v106
  %108 = vdwg.mxu0
  %v109 = vld [vmem:[%s2] sm:$0xff]
  %v110 = vld [vmem:[%s2 + $0x8] sm:$0xff]
  %v111 = vld [vmem:[%s2 + $0x10] sm:$0xff]
  %v112 = vld [vmem:[%s2 + $0x18] sm:$0xff]
  %vm113 = vcmask 261120
  %v115 = vsel %vm113, 0.0, 0
  %117 = vmatpush.msra.mxu0 0.0
  %118 = vmatpush.msra.mxu0 0.0
  %119 = vmatpush.msra.mxu0 0.0
  %120 = vmatpush.msra.mxu0 0.0
  %121 = vmatpush.msra.mxu0 0.0
  %122 = vmatpush.msra.mxu0 0.0
  %123 = vmatpush.msra.mxu0 0.0
  %124 = vmatpush.msra.mxu0 0.0
  %125 = vmatpush.msra.mxu0 0.0
  %126 = vmatpush.msra.mxu0 0.0
  %127 = vmatpush.msra.mxu0 0.0
  %128 = vmatpush.msra.mxu0 0.0
  %129 = vmatpush.msra.mxu0 %v112
  %130 = vmatpush.msra.mxu0 %v111
  %131 = vmatpush.msra.mxu0 %v110
  %132 = vmatpush.msra.mxu0 %v109
  %133 = vmatmul.f32.gmra.mxu0 %v115
  %v134 = vpop.f32.mrf.mxu0
  %v135 = vadd.f32 0.0, %v134
  %136 = vdwg.mxu0
  %v137 = vadd.f32 %v86, %v135
  %v138 = vxor.u32 %v137, 2147483648
  %v139 = vmul.f32 %v138, 1.442695
  %v140 = vpow.pop %v139
  %v141 = vadd.f32 %v140, 1.0
  %v142 = vrcp.pop %v141
  %v143 = vmul.f32 %v141, %v142
  %v144 = vsub.f32 1.0, %v143
  %v145 = vmul.f32 %v142, %v144
  %v146 = vadd.f32 %v142, %v145
  %vm147 = vweird.f32 %v141
  %vm148 = vweird.f32 %v142
  %vm149 = vmor %vm147, %vm148
  %v150 = vsel %vm149, %v142, %v146
  %v151 = vand.u32 2147483647, %v141
  %vm152 = vcmp.eq.f32.partialorder %v151, 8.507059e+37
  %v153 = vand.u32 %v141, 2147483648
  %v154 = vor.u32 1.1754944e-38, %v153
  %v155 = vsel %vm152, %v154, %v150
  %v156 = vmul.f32 1.0, %v155
  %v157 = vtanh.pop %v137
  %v158 = vmul.f32 %v156, 0.0
  %160 = vrot.lane.b32.xlu0 %v157, 64
  %v161 = vpop.permute.xlu0 %160
  %v163 = vmul.f32 %v156, %v161
  %165 = vrot.lane.b32.xlu0 %v163, 32
  %v166 = vpop.permute.xlu0 %165
  %v168 = vadd.f32 %v158, %v166
  %v169 = vtanh.pop %v168
  %171 = vrot.lane.b32.xlu0 %v169, 64
  %v172 = vpop.permute.xlu0 %171
  %v174 = vmul.f32 %v156, %v172
  %176 = vrot.lane.b32.xlu0 %v174, 32
  %v177 = vpop.permute.xlu0 %176
  %179 = vst.msk [vmem:[#allocation2] sm:$0xff] %vm113, %v177
  %v180 = vsel %vm113, %v177, 0
  %182 = vmatpush.msra.mxu0 0.0
  %183 = vmatpush.msra.mxu0 0.0
  %184 = vmatpush.msra.mxu0 0.0
  %185 = vmatpush.msra.mxu0 0.0
  %186 = vmatpush.msra.mxu0 0.0
  %187 = vmatpush.msra.mxu0 0.0
  %188 = vmatpush.msra.mxu0 0.0
  %189 = vmatpush.msra.mxu0 0.0
  %190 = vmatpush.msra.mxu0 0.0
  %191 = vmatpush.msra.mxu0 0.0
  %192 = vmatpush.msra.mxu0 0.0
  %193 = vmatpush.msra.mxu0 0.0
  %194 = vmatpush.msra.mxu0 %v112
  %195 = vmatpush.msra.mxu0 %v111
  %196 = vmatpush.msra.mxu0 %v110
  %197 = vmatpush.msra.mxu0 %v109
  %198 = vmatmul.f32.gmra.mxu0 %v180
  %v199 = vpop.f32.mrf.mxu0
  %v200 = vadd.f32 0.0, %v199
  %201 = vdwg.mxu0
  %v202 = vadd.f32 %v89, %v200
  %v203 = vxor.u32 %v202, 2147483648
  %v204 = vmul.f32 %v203, 1.442695
  %v205 = vpow.pop %v204
  %v206 = vadd.f32 %v205, 1.0
  %v207 = vrcp.pop %v206
  %v208 = vmul.f32 %v206, %v207
  %v209 = vsub.f32 1.0, %v208
  %v210 = vmul.f32 %v207, %v209
  %v211 = vadd.f32 %v207, %v210
  %vm212 = vweird.f32 %v206
  %vm213 = vweird.f32 %v207
  %vm214 = vmor %vm212, %vm213
  %v215 = vsel %vm214, %v207, %v211
  %v216 = vand.u32 2147483647, %v206
  %vm217 = vcmp.eq.f32.partialorder %v216, 8.507059e+37
  %v218 = vand.u32 %v206, 2147483648
  %v219 = vor.u32 1.1754944e-38, %v218
  %v220 = vsel %vm217, %v219, %v215
  %v221 = vmul.f32 1.0, %v220
  %v222 = vtanh.pop %v202
  %v223 = vmul.f32 %v221, %v168
  %225 = vrot.lane.b32.xlu0 %v222, 64
  %v226 = vpop.permute.xlu0 %225
  %v228 = vmul.f32 %v221, %v226
  %230 = vrot.lane.b32.xlu0 %v228, 32
  %v231 = vpop.permute.xlu0 %230
  %v233 = vadd.f32 %v223, %v231
  %v234 = vtanh.pop %v233
  %236 = vrot.lane.b32.xlu0 %v234, 64
  %v237 = vpop.permute.xlu0 %236
  %v239 = vmul.f32 %v221, %v237
  %241 = vrot.lane.b32.xlu0 %v239, 32
  %v242 = vpop.permute.xlu0 %241
  %244 = vst.msk [vmem:[#allocation2 + $0x8] sm:$0xff] %vm113, %v242
  %v245 = vsel %vm113, %v242, 0
  %247 = vmatpush.msra.mxu0 0.0
  %248 = vmatpush.msra.mxu0 0.0
  %249 = vmatpush.msra.mxu0 0.0
  %250 = vmatpush.msra.mxu0 0.0
  %251 = vmatpush.msra.mxu0 0.0
  %252 = vmatpush.msra.mxu0 0.0
  %253 = vmatpush.msra.mxu0 0.0
  %254 = vmatpush.msra.mxu0 0.0
  %255 = vmatpush.msra.mxu0 0.0
  %256 = vmatpush.msra.mxu0 0.0
  %257 = vmatpush.msra.mxu0 0.0
  %258 = vmatpush.msra.mxu0 0.0
  %259 = vmatpush.msra.mxu0 %v112
  %260 = vmatpush.msra.mxu0 %v111
  %261 = vmatpush.msra.mxu0 %v110
  %262 = vmatpush.msra.mxu0 %v109
  %263 = vmatmul.f32.gmra.mxu0 %v245
  %v264 = vpop.f32.mrf.mxu0
  %v265 = vadd.f32 0.0, %v264
  %266 = vdwg.mxu0
  %v267 = vadd.f32 %v92, %v265
  %v268 = vxor.u32 %v267, 2147483648
  %v269 = vmul.f32 %v268, 1.442695
  %v270 = vpow.pop %v269
  %v271 = vadd.f32 %v270, 1.0
  %v272 = vrcp.pop %v271
  %v273 = vmul.f32 %v271, %v272
  %v274 = vsub.f32 1.0, %v273
  %v275 = vmul.f32 %v272, %v274
  %v276 = vadd.f32 %v272, %v275
  %vm277 = vweird.f32 %v271
  %vm278 = vweird.f32 %v272
  %vm279 = vmor %vm277, %vm278
  %v280 = vsel %vm279, %v272, %v276
  %v281 = vand.u32 2147483647, %v271
  %vm282 = vcmp.eq.f32.partialorder %v281, 8.507059e+37
  %v283 = vand.u32 %v271, 2147483648
  %v284 = vor.u32 1.1754944e-38, %v283
  %v285 = vsel %vm282, %v284, %v280
  %v286 = vmul.f32 1.0, %v285
  %v287 = vtanh.pop %v267
  %v288 = vmul.f32 %v286, %v233
  %290 = vrot.lane.b32.xlu0 %v287, 64
  %v291 = vpop.permute.xlu0 %290
  %v293 = vmul.f32 %v286, %v291
  %295 = vrot.lane.b32.xlu0 %v293, 32
  %v296 = vpop.permute.xlu0 %295
  %v298 = vadd.f32 %v288, %v296
  %v299 = vtanh.pop %v298
  %301 = vrot.lane.b32.xlu0 %v299, 64
  %v302 = vpop.permute.xlu0 %301
  %v304 = vmul.f32 %v286, %v302
  %306 = vrot.lane.b32.xlu0 %v304, 32
  %v307 = vpop.permute.xlu0 %306
  %309 = vst.msk [vmem:[#allocation2 + $0x10] sm:$0xff] %vm113, %v307
  %v310 = vsel %vm113, %v307, 0
  %312 = vmatpush.msra.mxu0 0.0
  %313 = vmatpush.msra.mxu0 0.0
  %314 = vmatpush.msra.mxu0 0.0
  %315 = vmatpush.msra.mxu0 0.0
  %316 = vmatpush.msra.mxu0 0.0
  %317 = vmatpush.msra.mxu0 0.0
  %318 = vmatpush.msra.mxu0 0.0
  %319 = vmatpush.msra.mxu0 0.0
  %320 = vmatpush.msra.mxu0 0.0
  %321 = vmatpush.msra.mxu0 0.0
  %322 = vmatpush.msra.mxu0 0.0
  %323 = vmatpush.msra.mxu0 0.0
  %324 = vmatpush.msra.mxu0 %v112
  %325 = vmatpush.msra.mxu0 %v111
  %326 = vmatpush.msra.mxu0 %v110
  %327 = vmatpush.msra.mxu0 %v109
  %328 = vmatmul.f32.gmra.mxu0 %v310
  %v329 = vpop.f32.mrf.mxu0
  %v330 = vadd.f32 0.0, %v329
  %331 = vdwg.mxu0
  %v332 = vadd.f32 %v95, %v330
  %v333 = vxor.u32 %v332, 2147483648
  %v334 = vmul.f32 %v333, 1.442695
  %v335 = vpow.pop %v334
  %v336 = vadd.f32 %v335, 1.0
  %v337 = vrcp.pop %v336
  %v338 = vmul.f32 %v336, %v337
  %v339 = vsub.f32 1.0, %v338
  %v340 = vmul.f32 %v337, %v339
  %v341 = vadd.f32 %v337, %v340
  %vm342 = vweird.f32 %v336
  %vm343 = vweird.f32 %v337
  %vm344 = vmor %vm342, %vm343
  %v345 = vsel %vm344, %v337, %v341
  %v346 = vand.u32 2147483647, %v336
  %vm347 = vcmp.eq.f32.partialorder %v346, 8.507059e+37
  %v348 = vand.u32 %v336, 2147483648
  %v349 = vor.u32 1.1754944e-38, %v348
  %v350 = vsel %vm347, %v349, %v345
  %v351 = vmul.f32 1.0, %v350
  %v352 = vtanh.pop %v332
  %v353 = vmul.f32 %v351, %v298
  %355 = vrot.lane.b32.xlu0 %v352, 64
  %v356 = vpop.permute.xlu0 %355
  %v358 = vmul.f32 %v351, %v356
  %360 = vrot.lane.b32.xlu0 %v358, 32
  %v361 = vpop.permute.xlu0 %360
  %v363 = vadd.f32 %v353, %v361
  %v364 = vtanh.pop %v363
  %366 = vrot.lane.b32.xlu0 %v364, 64
  %v367 = vpop.permute.xlu0 %366
  %v369 = vmul.f32 %v351, %v367
  %371 = vrot.lane.b32.xlu0 %v369, 32
  %v372 = vpop.permute.xlu0 %371
  %374 = vst.msk [vmem:[#allocation2 + $0x18] sm:$0xff] %vm113, %v372
  %v375 = vsel %vm113, %v372, 0
  %377 = vmatpush.msra.mxu0 0.0
  %378 = vmatpush.msra.mxu0 0.0
  %379 = vmatpush.msra.mxu0 0.0
  %380 = vmatpush.msra.mxu0 0.0
  %381 = vmatpush.msra.mxu0 0.0
  %382 = vmatpush.msra.mxu0 0.0
  %383 = vmatpush.msra.mxu0 0.0
  %384 = vmatpush.msra.mxu0 0.0
  %385 = vmatpush.msra.mxu0 0.0
  %386 = vmatpush.msra.mxu0 0.0
  %387 = vmatpush.msra.mxu0 0.0
  %388 = vmatpush.msra.mxu0 0.0
  %389 = vmatpush.msra.mxu0 %v112
  %390 = vmatpush.msra.mxu0 %v111
  %391 = vmatpush.msra.mxu0 %v110
  %392 = vmatpush.msra.mxu0 %v109
  %393 = vmatmul.f32.gmra.mxu0 %v375
  %v394 = vpop.f32.mrf.mxu0
  %v395 = vadd.f32 0.0, %v394
  %396 = vdwg.mxu0
  %v397 = vadd.f32 %v98, %v395
  %v398 = vxor.u32 %v397, 2147483648
  %v399 = vmul.f32 %v398, 1.442695
  %v400 = vpow.pop %v399
  %v401 = vadd.f32 %v400, 1.0
  %v402 = vrcp.pop %v401
  %v403 = vmul.f32 %v401, %v402
  %v404 = vsub.f32 1.0, %v403
  %v405 = vmul.f32 %v402, %v404
  %v406 = vadd.f32 %v402, %v405
  %vm407 = vweird.f32 %v401
  %vm408 = vweird.f32 %v402
  %vm409 = vmor %vm407, %vm408
  %v410 = vsel %vm409, %v402, %v406
  %v411 = vand.u32 2147483647, %v401
  %vm412 = vcmp.eq.f32.partialorder %v411, 8.507059e+37
  %v413 = vand.u32 %v401, 2147483648
  %v414 = vor.u32 1.1754944e-38, %v413
  %v415 = vsel %vm412, %v414, %v410
  %v416 = vmul.f32 1.0, %v415
  %v417 = vtanh.pop %v397
  %v418 = vmul.f32 %v416, %v363
  %420 = vrot.lane.b32.xlu0 %v417, 64
  %v421 = vpop.permute.xlu0 %420
  %v423 = vmul.f32 %v416, %v421
  %425 = vrot.lane.b32.xlu0 %v423, 32
  %v426 = vpop.permute.xlu0 %425
  %v428 = vadd.f32 %v418, %v426
  %v429 = vtanh.pop %v428
  %431 = vrot.lane.b32.xlu0 %v429, 64
  %v432 = vpop.permute.xlu0 %431
  %v434 = vmul.f32 %v416, %v432
  %436 = vrot.lane.b32.xlu0 %v434, 32
  %v437 = vpop.permute.xlu0 %436
  %439 = vst.msk [vmem:[#allocation2 + $0x20] sm:$0xff] %vm113, %v437
  %v440 = vsel %vm113, %v437, 0
  %442 = vmatpush.msra.mxu0 0.0
  %443 = vmatpush.msra.mxu0 0.0
  %444 = vmatpush.msra.mxu0 0.0
  %445 = vmatpush.msra.mxu0 0.0
  %446 = vmatpush.msra.mxu0 0.0
  %447 = vmatpush.msra.mxu0 0.0
  %448 = vmatpush.msra.mxu0 0.0
  %449 = vmatpush.msra.mxu0 0.0
  %450 = vmatpush.msra.mxu0 0.0
  %451 = vmatpush.msra.mxu0 0.0
  %452 = vmatpush.msra.mxu0 0.0
  %453 = vmatpush.msra.mxu0 0.0
  %454 = vmatpush.msra.mxu0 %v112
  %455 = vmatpush.msra.mxu0 %v111
  %456 = vmatpush.msra.mxu0 %v110
  %457 = vmatpush.msra.mxu0 %v109
  %458 = vmatmul.f32.gmra.mxu0 %v440
  %v459 = vpop.f32.mrf.mxu0
  %v460 = vadd.f32 0.0, %v459
  %461 = vdwg.mxu0
  %v462 = vadd.f32 %v101, %v460
  %v463 = vxor.u32 %v462, 2147483648
  %v464 = vmul.f32 %v463, 1.442695
  %v465 = vpow.pop %v464
  %v466 = vadd.f32 %v465, 1.0
  %v467 = vrcp.pop %v466
  %v468 = vmul.f32 %v466, %v467
  %v469 = vsub.f32 1.0, %v468
  %v470 = vmul.f32 %v467, %v469
  %v471 = vadd.f32 %v467, %v470
  %vm472 = vweird.f32 %v466
  %vm473 = vweird.f32 %v467
  %vm474 = vmor %vm472, %vm473
  %v475 = vsel %vm474, %v467, %v471
  %v476 = vand.u32 2147483647, %v466
  %vm477 = vcmp.eq.f32.partialorder %v476, 8.507059e+37
  %v478 = vand.u32 %v466, 2147483648
  %v479 = vor.u32 1.1754944e-38, %v478
  %v480 = vsel %vm477, %v479, %v475
  %v481 = vmul.f32 1.0, %v480
  %v482 = vtanh.pop %v462
  %v483 = vmul.f32 %v481, %v428
  %485 = vrot.lane.b32.xlu0 %v482, 64
  %v486 = vpop.permute.xlu0 %485
  %v488 = vmul.f32 %v481, %v486
  %490 = vrot.lane.b32.xlu0 %v488, 32
  %v491 = vpop.permute.xlu0 %490
  %v493 = vadd.f32 %v483, %v491
  %v494 = vtanh.pop %v493
  %496 = vrot.lane.b32.xlu0 %v494, 64
  %v497 = vpop.permute.xlu0 %496
  %v499 = vmul.f32 %v481, %v497
  %501 = vrot.lane.b32.xlu0 %v499, 32
  %v502 = vpop.permute.xlu0 %501
  %504 = vst.msk [vmem:[#allocation2 + $0x28] sm:$0xff] %vm113, %v502
  %v505 = vsel %vm113, %v502, 0
  %507 = vmatpush.msra.mxu0 0.0
  %508 = vmatpush.msra.mxu0 0.0
  %509 = vmatpush.msra.mxu0 0.0
  %510 = vmatpush.msra.mxu0 0.0
  %511 = vmatpush.msra.mxu0 0.0
  %512 = vmatpush.msra.mxu0 0.0
  %513 = vmatpush.msra.mxu0 0.0
  %514 = vmatpush.msra.mxu0 0.0
  %515 = vmatpush.msra.mxu0 0.0
  %516 = vmatpush.msra.mxu0 0.0
  %517 = vmatpush.msra.mxu0 0.0
  %518 = vmatpush.msra.mxu0 0.0
  %519 = vmatpush.msra.mxu0 %v112
  %520 = vmatpush.msra.mxu0 %v111
  %521 = vmatpush.msra.mxu0 %v110
  %522 = vmatpush.msra.mxu0 %v109
  %523 = vmatmul.f32.gmra.mxu0 %v505
  %v524 = vpop.f32.mrf.mxu0
  %v525 = vadd.f32 0.0, %v524
  %526 = vdwg.mxu0
  %v527 = vadd.f32 %v104, %v525
  %v528 = vxor.u32 %v527, 2147483648
  %v529 = vmul.f32 %v528, 1.442695
  %v530 = vpow.pop %v529
  %v531 = vadd.f32 %v530, 1.0
  %v532 = vrcp.pop %v531
  %v533 = vmul.f32 %v531, %v532
  %v534 = vsub.f32 1.0, %v533
  %v535 = vmul.f32 %v532, %v534
  %v536 = vadd.f32 %v532, %v535
  %vm537 = vweird.f32 %v531
  %vm538 = vweird.f32 %v532
  %vm539 = vmor %vm537, %vm538
  %v540 = vsel %vm539, %v532, %v536
  %v541 = vand.u32 2147483647, %v531
  %vm542 = vcmp.eq.f32.partialorder %v541, 8.507059e+37
  %v543 = vand.u32 %v531, 2147483648
  %v544 = vor.u32 1.1754944e-38, %v543
  %v545 = vsel %vm542, %v544, %v540
  %v546 = vmul.f32 1.0, %v545
  %v547 = vtanh.pop %v527
  %v548 = vmul.f32 %v546, %v493
  %550 = vrot.lane.b32.xlu0 %v547, 64
  %v551 = vpop.permute.xlu0 %550
  %v553 = vmul.f32 %v546, %v551
  %555 = vrot.lane.b32.xlu0 %v553, 32
  %v556 = vpop.permute.xlu0 %555
  %v558 = vadd.f32 %v548, %v556
  %v559 = vtanh.pop %v558
  %561 = vrot.lane.b32.xlu0 %v559, 64
  %v562 = vpop.permute.xlu0 %561
  %v564 = vmul.f32 %v546, %v562
  %566 = vrot.lane.b32.xlu0 %v564, 32
  %v567 = vpop.permute.xlu0 %566
  %569 = vst.msk [vmem:[#allocation2 + $0x30] sm:$0xff] %vm113, %v567
  %v570 = vsel %vm113, %v567, 0
  %572 = vmatpush.msra.mxu0 0.0
  %573 = vmatpush.msra.mxu0 0.0
  %574 = vmatpush.msra.mxu0 0.0
  %575 = vmatpush.msra.mxu0 0.0
  %576 = vmatpush.msra.mxu0 0.0
  %577 = vmatpush.msra.mxu0 0.0
  %578 = vmatpush.msra.mxu0 0.0
  %579 = vmatpush.msra.mxu0 0.0
  %580 = vmatpush.msra.mxu0 0.0
  %581 = vmatpush.msra.mxu0 0.0
  %582 = vmatpush.msra.mxu0 0.0
  %583 = vmatpush.msra.mxu0 0.0
  %584 = vmatpush.msra.mxu0 %v112
  %585 = vmatpush.msra.mxu0 %v111
  %586 = vmatpush.msra.mxu0 %v110
  %587 = vmatpush.msra.mxu0 %v109
  %588 = vmatmul.f32.gmra.mxu0 %v570
  %v589 = vpop.f32.mrf.mxu0
  %v590 = vadd.f32 0.0, %v589
  %591 = vdwg.mxu0
  %v592 = vadd.f32 %v107, %v590
  %v593 = vxor.u32 %v592, 2147483648
  %v594 = vmul.f32 %v593, 1.442695
  %v595 = vpow.pop %v594
  %v596 = vadd.f32 %v595, 1.0
  %v597 = vrcp.pop %v596
  %v598 = vmul.f32 %v596, %v597
  %v599 = vsub.f32 1.0, %v598
  %v600 = vmul.f32 %v597, %v599
  %v601 = vadd.f32 %v597, %v600
  %vm602 = vweird.f32 %v596
  %vm603 = vweird.f32 %v597
  %vm604 = vmor %vm602, %vm603
  %v605 = vsel %vm604, %v597, %v601
  %v606 = vand.u32 2147483647, %v596
  %vm607 = vcmp.eq.f32.partialorder %v606, 8.507059e+37
  %v608 = vand.u32 %v596, 2147483648
  %v609 = vor.u32 1.1754944e-38, %v608
  %v610 = vsel %vm607, %v609, %v605
  %v611 = vmul.f32 1.0, %v610
  %v612 = vtanh.pop %v592
  %v613 = vmul.f32 %v611, %v558
  %615 = vrot.lane.b32.xlu0 %v612, 64
  %v616 = vpop.permute.xlu0 %615
  %v618 = vmul.f32 %v611, %v616
  %620 = vrot.lane.b32.xlu0 %v618, 32
  %v621 = vpop.permute.xlu0 %620
  %v623 = vadd.f32 %v613, %v621
  %v624 = vtanh.pop %v623
  %626 = vrot.lane.b32.xlu0 %v624, 64
  %v627 = vpop.permute.xlu0 %626
  %v629 = vmul.f32 %v611, %v627
  %631 = vrot.lane.b32.xlu0 %v629, 32
  %v632 = vpop.permute.xlu0 %631
  %634 = vst.msk [vmem:[#allocation2 + $0x38] sm:$0xff] %vm113, %v632
  %v635 = vld [vmem:[#allocation2] sm:$0xff]
  %v636 = vld [vmem:[#allocation2 + $0x8] sm:$0xff]
  %v637 = vld [vmem:[#allocation2 + $0x10] sm:$0xff]
  %v638 = vld [vmem:[#allocation2 + $0x18] sm:$0xff]
  %v639 = vld [vmem:[#allocation2 + $0x20] sm:$0xff]
  %v640 = vld [vmem:[#allocation2 + $0x28] sm:$0xff]
  %v641 = vld [vmem:[#allocation2 + $0x30] sm:$0xff]
  %v642 = vld [vmem:[#allocation2 + $0x38] sm:$0xff]
  %v643 = vld [vmem:[%s4] sm:$0xff]
  %v644 = vld [vmem:[%s4 + $0x8] sm:$0xff]
  %v645 = vld [vmem:[%s4 + $0x10] sm:$0xff]
  %v646 = vld [vmem:[%s4 + $0x18] sm:$0xff]
  %v647 = vld [vmem:[%s4 + $0x20] sm:$0xff]
  %v648 = vld [vmem:[%s4 + $0x28] sm:$0xff]
  %v649 = vld [vmem:[%s4 + $0x30] sm:$0xff]
  %v650 = vld [vmem:[%s4 + $0x38] sm:$0xff]
  %v651 = vld [vmem:[%s5] sm:$0x3]
  %v653 = vperm.slane %v651, 0
  %v654 = vperm.slane %v651, 1
  %v658 = vsel %vm113, %v635, 0
  %v661 = vsel %vm113, %v636, 0
  %v664 = vsel %vm113, %v637, 0
  %v667 = vsel %vm113, %v638, 0
  %v670 = vsel %vm113, %v639, 0
  %v673 = vsel %vm113, %v640, 0
  %v676 = vsel %vm113, %v641, 0
  %v679 = vsel %vm113, %v642, 0
  %681 = vmatpush.msra.mxu0 0.0
  %682 = vmatpush.msra.mxu0 0.0
  %683 = vmatpush.msra.mxu0 0.0
  %684 = vmatpush.msra.mxu0 0.0
  %685 = vmatpush.msra.mxu0 0.0
  %686 = vmatpush.msra.mxu0 0.0
  %687 = vmatpush.msra.mxu0 0.0
  %688 = vmatpush.msra.mxu0 0.0
  %689 = vmatpush.msra.mxu0 0.0
  %690 = vmatpush.msra.mxu0 0.0
  %691 = vmatpush.msra.mxu0 0.0
  %692 = vmatpush.msra.mxu0 0.0
  %693 = vmatpush.msra.mxu0 %v649
  %694 = vmatpush.msra.mxu0 %v647
  %695 = vmatpush.msra.mxu0 %v645
  %696 = vmatpush.msra.mxu0 %v643
  %697 = vmatmul.f32.gmra.mxu0 %v658
  %v698 = vpop.f32.mrf.mxu0
  %v699 = vadd.f32 %v653, %v698
  %700 = vmatmul.f32.gmra.mxu0 %v661
  %v701 = vpop.f32.mrf.mxu0
  %v702 = vadd.f32 %v653, %v701
  %703 = vmatmul.f32.gmra.mxu0 %v664
  %v704 = vpop.f32.mrf.mxu0
  %v705 = vadd.f32 %v653, %v704
  %706 = vmatmul.f32.gmra.mxu0 %v667
  %v707 = vpop.f32.mrf.mxu0
  %v708 = vadd.f32 %v653, %v707
  %709 = vmatmul.f32.gmra.mxu0 %v670
  %v710 = vpop.f32.mrf.mxu0
  %v711 = vadd.f32 %v653, %v710
  %712 = vmatmul.f32.gmra.mxu0 %v673
  %v713 = vpop.f32.mrf.mxu0
  %v714 = vadd.f32 %v653, %v713
  %715 = vmatmul.f32.gmra.mxu0 %v676
  %v716 = vpop.f32.mrf.mxu0
  %v717 = vadd.f32 %v653, %v716
  %718 = vmatmul.f32.gmra.mxu0 %v679
  %v719 = vpop.f32.mrf.mxu0
  %v720 = vadd.f32 %v653, %v719
  %721 = vdwg.mxu0
  %722 = vmatpush.msra.mxu0 0.0
  %723 = vmatpush.msra.mxu0 0.0
  %724 = vmatpush.msra.mxu0 0.0
  %725 = vmatpush.msra.mxu0 0.0
  %726 = vmatpush.msra.mxu0 0.0
  %727 = vmatpush.msra.mxu0 0.0
  %728 = vmatpush.msra.mxu0 0.0
  %729 = vmatpush.msra.mxu0 0.0
  %730 = vmatpush.msra.mxu0 0.0
  %731 = vmatpush.msra.mxu0 0.0
  %732 = vmatpush.msra.mxu0 0.0
  %733 = vmatpush.msra.mxu0 0.0
  %734 = vmatpush.msra.mxu0 %v650
  %735 = vmatpush.msra.mxu0 %v648
  %736 = vmatpush.msra.mxu0 %v646
  %737 = vmatpush.msra.mxu0 %v644
  %738 = vmatmul.f32.gmra.mxu0 %v658
  %v739 = vpop.f32.mrf.mxu0
  %v740 = vadd.f32 %v654, %v739
  %741 = vmatmul.f32.gmra.mxu0 %v661
  %v742 = vpop.f32.mrf.mxu0
  %v743 = vadd.f32 %v654, %v742
  %744 = vmatmul.f32.gmra.mxu0 %v664
  %v745 = vpop.f32.mrf.mxu0
  %v746 = vadd.f32 %v654, %v745
  %747 = vmatmul.f32.gmra.mxu0 %v667
  %v748 = vpop.f32.mrf.mxu0
  %v749 = vadd.f32 %v654, %v748
  %750 = vmatmul.f32.gmra.mxu0 %v670
  %v751 = vpop.f32.mrf.mxu0
  %v752 = vadd.f32 %v654, %v751
  %753 = vmatmul.f32.gmra.mxu0 %v673
  %v754 = vpop.f32.mrf.mxu0
  %v755 = vadd.f32 %v654, %v754
  %756 = vmatmul.f32.gmra.mxu0 %v676
  %v757 = vpop.f32.mrf.mxu0
  %v758 = vadd.f32 %v654, %v757
  %759 = vmatmul.f32.gmra.mxu0 %v679
  %v760 = vpop.f32.mrf.mxu0
  %v761 = vadd.f32 %v654, %v760
  %762 = vdwg.mxu0
  %v763 = vld [vmem:[%s6] sm:$0xff]
  %v764 = vld [vmem:[%s6 + $0x8] sm:$0xff]
  %v765 = vld [vmem:[%s6 + $0x10] sm:$0xff]
  %v766 = vld [vmem:[%s6 + $0x18] sm:$0xff]
  %v767 = vld [vmem:[%s6 + $0x20] sm:$0xff]
  %v768 = vld [vmem:[%s6 + $0x28] sm:$0xff]
  %v769 = vld [vmem:[%s6 + $0x30] sm:$0xff]
  %v770 = vld [vmem:[%s6 + $0x38] sm:$0xff]
  %v771 = vld [vmem:[%s6 + $0x40] sm:$0xff]
  %v772 = vld [vmem:[%s6 + $0x48] sm:$0xff]
  %v773 = vld [vmem:[%s6 + $0x50] sm:$0xff]
  %v774 = vld [vmem:[%s6 + $0x58] sm:$0xff]
  %v775 = vld [vmem:[%s6 + $0x60] sm:$0xff]
  %v776 = vld [vmem:[%s6 + $0x68] sm:$0xff]
  %v777 = vld [vmem:[%s6 + $0x70] sm:$0xff]
  %v778 = vld [vmem:[%s6 + $0x78] sm:$0xff]
  %v779 = vld [vmem:[%s6 + $0x80] sm:$0xff]
  %v780 = vld [vmem:[%s6 + $0x88] sm:$0xff]
  %v781 = vld [vmem:[%s6 + $0x90] sm:$0xff]
  %v782 = vld [vmem:[%s6 + $0x98] sm:$0xff]
  %v783 = vld [vmem:[%s7] sm:$0x1]
  %v785 = vperm.slane %v783, 0
  %v788 = vsel %vm113, %v740, 0
  %v791 = vsel %vm113, %v743, 0
  %v794 = vsel %vm113, %v746, 0
  %v797 = vsel %vm113, %v749, 0
  %v800 = vsel %vm113, %v752, 0
  %v803 = vsel %vm113, %v755, 0
  %v806 = vsel %vm113, %v758, 0
  %v809 = vsel %vm113, %v761, 0
  %811 = vmatpush.msra.mxu0 %v778
  %812 = vmatpush.msra.mxu0 %v777
  %813 = vmatpush.msra.mxu0 %v776
  %814 = vmatpush.msra.mxu0 %v775
  %815 = vmatpush.msra.mxu0 %v774
  %816 = vmatpush.msra.mxu0 %v773
  %817 = vmatpush.msra.mxu0 %v772
  %818 = vmatpush.msra.mxu0 %v771
  %819 = vmatpush.msra.mxu0 %v770
  %820 = vmatpush.msra.mxu0 %v769
  %821 = vmatpush.msra.mxu0 %v768
  %822 = vmatpush.msra.mxu0 %v767
  %823 = vmatpush.msra.mxu0 %v766
  %824 = vmatpush.msra.mxu0 %v765
  %825 = vmatpush.msra.mxu0 %v764
  %826 = vmatpush.msra.mxu0 %v763
  %827 = vmatmul.f32.gmra.mxu0 %v699
  %v828 = vpop.f32.mrf.mxu0
  %v829 = vadd.f32 %v785, %v828
  %830 = vmatmul.f32.gmra.mxu0 %v702
  %v831 = vpop.f32.mrf.mxu0
  %v832 = vadd.f32 %v785, %v831
  %833 = vmatmul.f32.gmra.mxu0 %v705
  %v834 = vpop.f32.mrf.mxu0
  %v835 = vadd.f32 %v785, %v834
  %836 = vmatmul.f32.gmra.mxu0 %v708
  %v837 = vpop.f32.mrf.mxu0
  %v838 = vadd.f32 %v785, %v837
  %839 = vmatmul.f32.gmra.mxu0 %v711
  %v840 = vpop.f32.mrf.mxu0
  %v841 = vadd.f32 %v785, %v840
  %842 = vmatmul.f32.gmra.mxu0 %v714
  %v843 = vpop.f32.mrf.mxu0
  %v844 = vadd.f32 %v785, %v843
  %845 = vmatmul.f32.gmra.mxu0 %v717
  %v846 = vpop.f32.mrf.mxu0
  %v847 = vadd.f32 %v785, %v846
  %848 = vmatmul.f32.gmra.mxu0 %v720
  %v849 = vpop.f32.mrf.mxu0
  %v850 = vadd.f32 %v785, %v849
  %851 = vdwg.mxu0
  %852 = vmatpush.msra.mxu0 0.0
  %853 = vmatpush.msra.mxu0 0.0
  %854 = vmatpush.msra.mxu0 0.0
  %855 = vmatpush.msra.mxu0 0.0
  %856 = vmatpush.msra.mxu0 0.0
  %857 = vmatpush.msra.mxu0 0.0
  %858 = vmatpush.msra.mxu0 0.0
  %859 = vmatpush.msra.mxu0 0.0
  %860 = vmatpush.msra.mxu0 0.0
  %861 = vmatpush.msra.mxu0 0.0
  %862 = vmatpush.msra.mxu0 0.0
  %863 = vmatpush.msra.mxu0 0.0
  %864 = vmatpush.msra.mxu0 %v782
  %865 = vmatpush.msra.mxu0 %v781
  %866 = vmatpush.msra.mxu0 %v780
  %867 = vmatpush.msra.mxu0 %v779
  %868 = vmatmul.f32.gmra.mxu0 %v788
  %v869 = vpop.f32.mrf.mxu0
  %v870 = vadd.f32 %v829, %v869
  %871 = vmatmul.f32.gmra.mxu0 %v791
  %v872 = vpop.f32.mrf.mxu0
  %v873 = vadd.f32 %v832, %v872
  %874 = vmatmul.f32.gmra.mxu0 %v794
  %v875 = vpop.f32.mrf.mxu0
  %v876 = vadd.f32 %v835, %v875
  %877 = vmatmul.f32.gmra.mxu0 %v797
  %v878 = vpop.f32.mrf.mxu0
  %v879 = vadd.f32 %v838, %v878
  %880 = vmatmul.f32.gmra.mxu0 %v800
  %v881 = vpop.f32.mrf.mxu0
  %v882 = vadd.f32 %v841, %v881
  %883 = vmatmul.f32.gmra.mxu0 %v803
  %v884 = vpop.f32.mrf.mxu0
  %v885 = vadd.f32 %v844, %v884
  %886 = vmatmul.f32.gmra.mxu0 %v806
  %v887 = vpop.f32.mrf.mxu0
  %v888 = vadd.f32 %v847, %v887
  %889 = vmatmul.f32.gmra.mxu0 %v809
  %v890 = vpop.f32.mrf.mxu0
  %v891 = vadd.f32 %v850, %v890
  %892 = vdwg.mxu0
  %vm893 = vcmask 31744
  %894 = vst.msk [vmem:[%s8] sm:$0xff] %vm893, %v870
  %895 = vst.msk [vmem:[%s8 + $0x8] sm:$0xff] %vm893, %v873
  %896 = vst.msk [vmem:[%s8 + $0x10] sm:$0xff] %vm893, %v876
  %897 = vst.msk [vmem:[%s8 + $0x18] sm:$0xff] %vm893, %v879
  %898 = vst.msk [vmem:[%s8 + $0x20] sm:$0xff] %vm893, %v882
  %899 = vst.msk [vmem:[%s8 + $0x28] sm:$0xff] %vm893, %v885
  %900 = vst.msk [vmem:[%s8 + $0x30] sm:$0xff] %vm893, %v888
  %901 = vst.msk [vmem:[%s8 + $0x38] sm:$0xff] %vm893, %v891
  // Predicated region
  $region34: #{tpu_custom_call.1} parent=0 // pred_check
    _
  $region35: #{tpu_custom_call.1} parent=0 // pred_check_branch
    %903 = sbr.rel (0) target = $region37
  $region36: #{tpu_custom_call.1} parent=0 // pred_region
    _
  $region37: #{tpu_custom_call.1} parent=0 // pred_fallthru
    _
  // Predicated region
  $region38: #{tpu_custom_call.1} parent=0 // pred_check
    _
  $region39: #{tpu_custom_call.1} parent=0 // pred_check_branch
    %905 = sbr.rel (0) target = $region41
  $region40: #{tpu_custom_call.1} parent=0 // pred_region
    _
  $region41: #{tpu_custom_call.1} parent=0 // pred_fallthru
    _

</llo_original>
